<compile_context>
chip_gen: v7x
topology: tpu7x:2x2x1
jax: 0.10.0
libtpu: 0.0.40
codegen_flags: <defaults>
</compile_context>

<pallas_src>
import functools

import jax
import jax.numpy as jnp
import numpy as np
from jax.experimental import pallas as pl
from jax.experimental.pallas import tpu as pltpu


def _attn_head_kernel(x_ref, w_ref, cos_ref, sin_ref, o_ref, *,
                      head_size, approx_recip):
    """One batch element per grid step.

    x_ref   : (T, C)       activations (compute dtype, e.g. f32 or bf16)
    w_ref   : (C, 5*hs)    fused [Wq*scale | Wk | Wv | swap(Wq*scale) | swap(Wk)]
    cos_ref : (T, hs)      [cos | cos]            (f32)
    sin_ref : (T, hs)      [-sin | sin]           (f32)
    o_ref   : (T, hs)      output
    """
    hs = head_size
    x = x_ref[...]
    t = x.shape[0]

    # Single fused projection matmul (q, k, v and the rotate-half images of
    # q and k), accumulated in f32 on the MXU.
    qkv = jnp.dot(x, w_ref[...], preferred_element_type=jnp.float32)  # (T, 5*hs)

    q    = qkv[:, 0 * hs:1 * hs]   # already scaled by C**-0.5
    k    = qkv[:, 1 * hs:2 * hs]
    v    = qkv[:, 2 * hs:3 * hs]
    q_sw = qkv[:, 3 * hs:4 * hs]   # = swap-halves(q)
    k_sw = qkv[:, 4 * hs:5 * hs]   # = swap-halves(k)

    cos = cos_ref[...]
    sin = sin_ref[...]
    # RoPE in half-split layout (f32 elementwise math).
    q_rot = q * cos + q_sw * sin
    k_rot = k * cos + k_sw * sin

    # Single full-K score matmul; scale already folded into Wq.
    s = jnp.dot(q_rot, k_rot.T, preferred_element_type=jnp.float32)   # (T, T)

    # Causal mask + numerically-stable softmax (all in f32).
    row = jax.lax.broadcasted_iota(jnp.int32, (t, t), 0)
    col = jax.lax.broadcasted_iota(jnp.int32, (t, t), 1)
    s = jnp.where(col <= row, s, -jnp.inf)
    s = s - jnp.max(s, axis=-1, keepdims=True)
    e = jnp.exp(s)
    denom = jnp.sum(e, axis=-1, keepdims=True)
    # reciprocal goes to the EUP slot; broadcast-mul is cheaper than T*T divides.
    p = e * pl.reciprocal(denom, approx=approx_recip)

    # Feed the MXU in the streamed compute dtype; accumulate in f32.
    cdt = x.dtype
    out = jnp.dot(p.astype(cdt), v.astype(cdt), preferred_element_type=jnp.float32)
    o_ref[...] = out.astype(o_ref.dtype)


def attention_head_forward(x, wq, wk, wv, freqs, *,
                           compute_dtype=None, approx_recip=True):
    """Forward pass of the PyTorch `AttentionHead` module.

    x      : (B, T, C)            activations
    wq/wk/wv : (head_size, C)     nn.Linear weights (out_features, in_features), no bias
    freqs  : (T, head_size // 2)  RoPE angles (freq_cis = exp(i * freqs))
    compute_dtype : dtype streamed into the MXU (bf16 recommended on v6e/v7x);
                    RoPE / softmax math and accumulation stay in f32.
    """
    B, T, C = x.shape
    hs, c_w = wq.shape
    assert c_w == C and wk.shape == (hs, C) and wv.shape == (hs, C), "weight shape mismatch"
    assert hs % 2 == 0, "head_size must be even for RoPE"
    assert freqs.shape == (T, hs // 2), "freqs must be (T, head_size//2)"
    hh = hs // 2

    if compute_dtype is None:
        compute_dtype = x.dtype

    # nn.Linear computes x @ W.T  ->  store weights as (C, hs).
    wq_t = wq.T.astype(jnp.float32)
    wk_t = wk.T.astype(jnp.float32)
    wv_t = wv.T.astype(jnp.float32)

    # --- one-time weight transforms (wrapper-side, f32) ---------------------
    # interleaved (re0,im0,re1,im1,...) -> half-split ([re...|im...]) columns.
    perm = jnp.concatenate([jnp.arange(0, hs, 2), jnp.arange(1, hs, 2)])
    scale = float(C) ** -0.5                      # module uses C**-0.5, not hs**-0.5
    wq_p = wq_t[:, perm] * scale                  # scale folded into Wq
    wk_p = wk_t[:, perm]
    # rotate-half folded into extra weight columns: swap(x@W) == x@swap_cols(W)
    swap = jnp.concatenate([jnp.arange(hh, hs), jnp.arange(0, hh)])
    w_fused = jnp.concatenate(
        [wq_p, wk_p, wv_t, wq_p[:, swap], wk_p[:, swap]], axis=1
    ).astype(compute_dtype)                       # (C, 5*hs)

    cos = jnp.cos(freqs).astype(jnp.float32)      # (T, hh)
    sin = jnp.sin(freqs).astype(jnp.float32)
    cos_cat = jnp.concatenate([cos, cos], axis=1)     # (T, hs)
    sin_sgn = jnp.concatenate([-sin, sin], axis=1)    # (T, hs)

    x_in = x.astype(compute_dtype)

    kernel = functools.partial(_attn_head_kernel,
                               head_size=hs, approx_recip=approx_recip)

    out = pl.pallas_call(
        kernel,
        out_shape=jax.ShapeDtypeStruct((B, T, hs), x.dtype),
        grid_spec=pltpu.PrefetchScalarGridSpec(
            num_scalar_prefetch=0,
            grid=(B,),                                            # batch-parallel
            in_specs=[
                pl.BlockSpec((None, T, C), lambda b: (b, 0, 0)),  # x (batch dim squeezed)
                pl.BlockSpec((C, 5 * hs), lambda b: (0, 0)),      # fused weights (resident)
                pl.BlockSpec((T, hs), lambda b: (0, 0)),          # cos (resident)
                pl.BlockSpec((T, hs), lambda b: (0, 0)),          # sin (resident)
            ],
            out_specs=pl.BlockSpec((None, T, hs), lambda b: (b, 0, 0)),
        ),
        compiler_params=pltpu.CompilerParams(
            dimension_semantics=("parallel",)),
    )(x_in, w_fused, cos_cat, sin_sgn)
    return out


# ---------------- pure-JAX reference (mirrors the PyTorch module) -------------
def _ref_attention_head(x, wq, wk, wv, freqs):
    B, T, C = x.shape
    q = x @ wq.T
    k = x @ wk.T
    v = x @ wv.T
    cos = jnp.cos(freqs)
    sin = jnp.sin(freqs)

    def rope(t):  # interleaved complex rotation, as in apply_rope
        tr = t[..., 0::2]
        ti = t[..., 1::2]
        o_re = tr * cos - ti * sin
        o_im = tr * sin + ti * cos
        return jnp.stack([o_re, o_im], axis=-1).reshape(t.shape)

    q, k = rope(q), rope(k)
    w = (q @ jnp.swapaxes(k, -1, -2)) * (float(C) ** -0.5)
    mask = jnp.tril(jnp.ones((T, T), dtype=jnp.float32))
    w = jnp.where(mask == 0, -jnp.inf, w)
    w = jax.nn.softmax(w, axis=-1)
    return w @ v


if __name__ == "__main__":
    # Small shapes consistent with the module.
    B = 2
    n_embd = 32        # C
    head_size = 8
    block_size = 8     # T
    theta = 10000.0

    key = jax.random.PRNGKey(0)
    kx, kq, kk, kv = jax.random.split(key, 4)
    x = jax.random.normal(kx, (B, block_size, n_embd), dtype=jnp.float32)
    # Deterministic nn.Linear-style weights: (out_features, in_features).
    wq = 0.1 * jax.random.normal(kq, (head_size, n_embd), dtype=jnp.float32)
    wk = 0.1 * jax.random.normal(kk, (head_size, n_embd), dtype=jnp.float32)
    wv = 0.1 * jax.random.normal(kv, (head_size, n_embd), dtype=jnp.float32)

    # get_freq_cis angles: outer(positions, 1/theta^(2j/head_size)).
    inv_freq = 1.0 / (theta ** (jnp.arange(0, head_size, 2, dtype=jnp.float32) / head_size))
    freqs = jnp.arange(block_size, dtype=jnp.float32)[:, None] * inv_freq[None, :]  # (T, hs//2)

    ref = _ref_attention_head(x, wq, wk, wv, freqs)

    # Exact-math path (f32 streamed operands, exact reciprocal): tight check.
    out_f32 = attention_head_forward(x, wq, wk, wv, freqs,
                                     compute_dtype=jnp.float32, approx_recip=False)
    out_f32 = jax.block_until_ready(out_f32)
    np.testing.assert_allclose(np.asarray(out_f32), np.asarray(ref), rtol=1e-5, atol=1e-5)

    # Fast path (bf16 streamed operands into the MXU, EUP approx reciprocal);
    # tolerance reflects bf16 inputs + approximate reciprocal.
    out_fast = attention_head_forward(x, wq, wk, wv, freqs,
                                      compute_dtype=jnp.bfloat16, approx_recip=True)
    out_fast = jax.block_until_ready(out_fast)
    np.testing.assert_allclose(np.asarray(out_fast, dtype=np.float32), np.asarray(ref),
                               rtol=3e-2, atol=3e-2)

    print("KERNEL_OK")
</pallas_src>

<mosaic_0001>
module attributes {stable_mosaic.version = 11 : i64} {
  func.func @_attn_head_kernel(%arg0: i32, %arg1: memref<1x8x32xf32, #tpu.memory_space<vmem>>, %arg2: memref<32x40xf32, #tpu.memory_space<vmem>>, %arg3: memref<8x8xf32, #tpu.memory_space<vmem>>, %arg4: memref<8x8xf32, #tpu.memory_space<vmem>>, %arg5: memref<1x8x8xf32, #tpu.memory_space<vmem>>) attributes {dimension_semantics = [#tpu.dimension_semantics<parallel>], iteration_bounds = array<i64: 2>, scalar_prefetch = 0 : i64, scratch_operands = 0 : i64, tpu.core_type = #tpu.core_type<tc>, window_params = [{transform_indices = @transform_0, window_bounds = array<i64: 1, 8, 32>}, {pipeline_mode = #tpu.pipeline_mode<synchronous>, transform_indices = @transform_1, window_bounds = array<i64: 32, 40>}, {pipeline_mode = #tpu.pipeline_mode<synchronous>, transform_indices = @transform_2, window_bounds = array<i64: 8, 8>}, {pipeline_mode = #tpu.pipeline_mode<synchronous>, transform_indices = @transform_3, window_bounds = array<i64: 8, 8>}, {transform_indices = @transform_4, window_bounds = array<i64: 1, 8, 8>}]} {
    %c0 = arith.constant 0 : index
    %c0_0 = arith.constant 0 : index
    %c0_1 = arith.constant 0 : index
    %0 = vector.load %arg1[%c0, %c0_0, %c0_1] : memref<1x8x32xf32, #tpu.memory_space<vmem>>, vector<1x8x32xf32>
    %1 = vector.shape_cast %0 : vector<1x8x32xf32> to vector<8x32xf32>
    %c0_2 = arith.constant 0 : index
    %c0_3 = arith.constant 0 : index
    %2 = vector.load %arg2[%c0_2, %c0_3] : memref<32x40xf32, #tpu.memory_space<vmem>>, vector<32x40xf32>
    %cst = arith.constant dense<0.000000e+00> : vector<8x40xf32>
    %3 = tpu.matmul %1, %2, %cst {dimension_numbers = #tpu.dot_dimension_numbers<[1], [0], [0], [1], [0, 0, 1, 1], [], []>} : vector<8x32xf32>, vector<32x40xf32>, vector<8x40xf32> -> vector<8x40xf32>
    %4 = vector.extract_strided_slice %3 {offsets = [0, 0], sizes = [8, 8], strides = [1, 1]} : vector<8x40xf32> to vector<8x8xf32>
    %5 = vector.extract_strided_slice %3 {offsets = [0, 8], sizes = [8, 8], strides = [1, 1]} : vector<8x40xf32> to vector<8x8xf32>
    %6 = vector.extract_strided_slice %3 {offsets = [0, 16], sizes = [8, 8], strides = [1, 1]} : vector<8x40xf32> to vector<8x8xf32>
    %7 = vector.extract_strided_slice %3 {offsets = [0, 24], sizes = [8, 8], strides = [1, 1]} : vector<8x40xf32> to vector<8x8xf32>
    %8 = vector.extract_strided_slice %3 {offsets = [0, 32], sizes = [8, 8], strides = [1, 1]} : vector<8x40xf32> to vector<8x8xf32>
    %c0_4 = arith.constant 0 : index
    %c0_5 = arith.constant 0 : index
    %9 = vector.load %arg3[%c0_4, %c0_5] : memref<8x8xf32, #tpu.memory_space<vmem>>, vector<8x8xf32>
    %c0_6 = arith.constant 0 : index
    %c0_7 = arith.constant 0 : index
    %10 = vector.load %arg4[%c0_6, %c0_7] : memref<8x8xf32, #tpu.memory_space<vmem>>, vector<8x8xf32>
    %11 = arith.mulf %4, %9 : vector<8x8xf32>
    %12 = arith.mulf %7, %10 : vector<8x8xf32>
    %13 = arith.addf %11, %12 : vector<8x8xf32>
    %14 = arith.mulf %5, %9 : vector<8x8xf32>
    %15 = arith.mulf %8, %10 : vector<8x8xf32>
    %16 = arith.addf %14, %15 : vector<8x8xf32>
    %17 = tpu.transpose %16, [1, 0] : vector<8x8xf32> -> vector<8x8xf32>
    %cst_8 = arith.constant dense<0.000000e+00> : vector<8x8xf32>
    %18 = tpu.matmul %13, %17, %cst_8 {dimension_numbers = #tpu.dot_dimension_numbers<[1], [0], [0], [1], [0, 0, 1, 1], [], []>} : vector<8x8xf32>, vector<8x8xf32>, vector<8x8xf32> -> vector<8x8xf32>
    %19 = tpu.iota {dimensions = array<i32: 0>} : vector<8x8xi32>
    %20 = tpu.iota {dimensions = array<i32: 1>} : vector<8x8xi32>
    %21 = arith.cmpi sle, %20, %19 : vector<8x8xi32>
    %cst_9 = arith.constant 0xFF800000 : f32
    %22 = vector.broadcast %cst_9 : f32 to vector<8x8xf32>
    %23 = arith.select %21, %18, %22 : vector<8x8xi1>, vector<8x8xf32>
    %cst_10 = arith.constant dense<0xFF800000> : vector<8xf32>
    %24 = vector.multi_reduction <maximumf>, %23, %cst_10 [1] : vector<8x8xf32> to vector<8xf32>
    %25 = vector.shape_cast %24 : vector<8xf32> to vector<8x1xf32>
    %26 = vector.broadcast %25 : vector<8x1xf32> to vector<8x8xf32>
    %27 = arith.subf %23, %26 : vector<8x8xf32>
    %28 = math.exp %27 : vector<8x8xf32>
    %cst_11 = arith.constant dense<0.000000e+00> : vector<8xf32>
    %29 = vector.multi_reduction <add>, %28, %cst_11 [1] : vector<8x8xf32> to vector<8xf32>
    %30 = vector.shape_cast %29 : vector<8xf32> to vector<8x1xf32>
    %31 = tpu.reciprocal %30 : vector<8x1xf32> -> vector<8x1xf32>
    %32 = vector.broadcast %31 : vector<8x1xf32> to vector<8x8xf32>
    %33 = arith.mulf %28, %32 : vector<8x8xf32>
    %cst_12 = arith.constant dense<0.000000e+00> : vector<8x8xf32>
    %34 = tpu.matmul %33, %6, %cst_12 {dimension_numbers = #tpu.dot_dimension_numbers<[1], [0], [0], [1], [0, 0, 1, 1], [], []>} : vector<8x8xf32>, vector<8x8xf32>, vector<8x8xf32> -> vector<8x8xf32>
    %c0_13 = arith.constant 0 : index
    %c0_14 = arith.constant 0 : index
    %c0_15 = arith.constant 0 : index
    %35 = vector.load %arg5[%c0_13, %c0_14, %c0_15] : memref<1x8x8xf32, #tpu.memory_space<vmem>>, vector<1x8x8xf32>
    %36 = vector.shape_cast %35 : vector<1x8x8xf32> to vector<8x8xf32>
    %37 = vector.shape_cast %34 : vector<8x8xf32> to vector<1x8x8xf32>
    tpu.vector_store %arg5[%c0_13, %c0_14, %c0_15], %37 {strides = array<i32>} : memref<1x8x8xf32, #tpu.memory_space<vmem>>, vector<1x8x8xf32>,
    return
  }
  func.func @transform_0(%arg0: i32) -> (i32, i32, i32) {
    %c0_i32 = arith.constant 0 : i32
    %c0_i32_0 = arith.constant 0 : i32
    %c0_i32_1 = arith.constant 0 : i32
    return %arg0, %c0_i32, %c0_i32_0 : i32, i32, i32
  }
  func.func @transform_1(%arg0: i32) -> (i32, i32) {
    %c0_i32 = arith.constant 0 : i32
    %c0_i32_0 = arith.constant 0 : i32
    %c0_i32_1 = arith.constant 0 : i32
    return %c0_i32, %c0_i32_0 : i32, i32
  }
  func.func @transform_2(%arg0: i32) -> (i32, i32) {
    %c0_i32 = arith.constant 0 : i32
    %c0_i32_0 = arith.constant 0 : i32
    %c0_i32_1 = arith.constant 0 : i32
    return %c0_i32, %c0_i32_0 : i32, i32
  }
  func.func @transform_3(%arg0: i32) -> (i32, i32) {
    %c0_i32 = arith.constant 0 : i32
    %c0_i32_0 = arith.constant 0 : i32
    %c0_i32_1 = arith.constant 0 : i32
    return %c0_i32, %c0_i32_0 : i32, i32
  }
  func.func @transform_4(%arg0: i32) -> (i32, i32, i32) {
    %c0_i32 = arith.constant 0 : i32
    %c0_i32_0 = arith.constant 0 : i32
    %c0_i32_1 = arith.constant 0 : i32
    return %arg0, %c0_i32, %c0_i32_0 : i32, i32, i32
  }
}

</mosaic_0001>

<llo_original>
// kernel: tpu_custom_call.1
$region0: #{tpu_custom_call.1}
  #allocation0 [shape = 'u32[]', space=smem, size = 0x4, offset = 0x4, fixed_abs, tag = 'smem constant byte address 0x4 - core index']
  #allocation1 [shape = 'u32[144,128]{1,0:T(1,128)}', space=vmem, size = 0x12000, scoped, tag = 'internal scratch']
  %s0 = inlined_call_operand.hbm [shape: f32[2,8,32], index: 0, kind: input, shape index: {}]
  %s1 = inlined_call_operand.hbm [shape: f32[32,40], index: 1, kind: input, shape index: {}]
  %s2 = inlined_call_operand.hbm [shape: f32[8,8], index: 2, kind: input, shape index: {}]
  %s3 = inlined_call_operand.vmem [shape: f32[8,8], index: 3, kind: input, shape index: {}]
  %s4 = inlined_call_operand.hbm [shape: f32[2,8,8], index: 4, kind: output, shape index: {}]
  %s5 = sld [smem:[#allocation0]]
  $region61: #{tpu_custom_call.1} parent=0
    _
  %s7 = ssub.s32 1, %s5
  %s8 = scalar_select 0, %s7, %s5
  $region1: #{tpu_custom_call.1} parent=0
    #allocation2 [shape = 'u8[8192]{0}', space=vmem, size = 0x2000, scoped, tag = 'input window, operand 0']
    #allocation3 [shape = 's32[2]{0}', space=sflag, size = 0x8, scoped, tag = 'scoped memory for tpu_custom_call.1']
    #allocation4 [shape = 's32[2]{0}', space=sflag, size = 0x8, scoped, tag = 'scoped memory for tpu_custom_call.1']
    #allocation5 [shape = 'u8[16384]{0}', space=vmem, size = 0x4000, scoped, tag = 'input window, operand 1, single buffered']
    #allocation6 [shape = 's32[1]{0}', space=sflag, size = 0x4, scoped, tag = 'scoped memory for tpu_custom_call.1']
    #allocation7 [shape = 'u8[4096]{0}', space=vmem, size = 0x1000, scoped, tag = 'input window, operand 2, single buffered']
    #allocation8 [shape = 'u8[8192]{0}', space=vmem, size = 0x2000, scoped, tag = 'output window, operand 0']
    %9 = vsyncpa [#allocation3], 0
    %s10 = scalar_lea.sflag [#allocation3], 1
    %11 = vsyncpa %s10, 0
    %12 = vsyncpa [#allocation6], 0
    %13 = vsyncpa [#allocation4], 0
    %s14 = scalar_lea.sflag [#allocation4], 1
    %15 = vsyncpa %s14, 0
    loop: start=0, step=1, limit=4
    $region2: #{tpu_custom_call.1} parent=1 // loop_pre_header
      _
    $region3: #{tpu_custom_call.1} parent=1 // loop_header
      %s17 = sphi 0, %s21
      %p18 = scmp.ge.s32.totalorder %s17, 4
      %s27 = sphi 0, %s29
      %s30 = sphi 0, %s27
      %s31 = sphi 0, %s30
      %s47 = sphi 0, %s31
      %s51 = sphi 0, %s51
      %s53 = sphi 0, %s51
      %s54 = sphi 0, %s53
      %s68 = sphi 0, %s54
      %s72 = sphi 0, %s72
      %s74 = sphi 0, %s72
      %s75 = sphi 0, %s74
      %s89 = sphi 0, %s75
      %s93 = sphi 0, %s93
      %s95 = sphi 0, %s93
      %s96 = sphi 0, %s95
      %s110 = sphi 0, %s96
      %s116 = sphi 0, %s118
      %s119 = sphi 0, %s116
      %s120 = sphi 0, %s119
      %s136 = sphi 0, %s120
    $region4: #{tpu_custom_call.1} parent=1 // loop_header_branch
      %20 = sbr.rel (%p18) target = $region8
    $region5: #{tpu_custom_call.1} parent=1 // loop_body
      %s22 = ssub.s32 %s17, 1
      %s23 = ssub.s32 %s17, 2
      %s24 = sadd.s32 %s17, 1
      %s25 = ssub.s32 %s17, %s24
      %p26 = scmp.eq.s32.totalorder %s25, 0
      %s28 = sadd.s32 %s27, 1
      %s29 = scalar_select %p26, %s27, %s28
      %p32 = pneg %p26
      %p33 = scmp.eq.s32.totalorder %s17, 1
      %p34 = por %p32, %p33
      %p35 = scmp.ne.s32.totalorder %s27, %s30
      %p36 = scmp.eq.s32.totalorder %s17, 0
      %p37 = por %p35, %p36
      %p38 = scmp.ne.s32.totalorder %s27, %s30
      %p39 = scmp.eq.s32.totalorder %s22, 1
      %p40 = por %p38, %p39
      %p41 = scmp.ne.s32.totalorder %s30, %s31
      %p42 = scmp.eq.s32.totalorder %s22, 0
      %p43 = por %p41, %p42
      %p44 = scmp.ne.s32.totalorder %s30, %s31
      %p45 = scmp.eq.s32.totalorder %s23, 1
      %p46 = por %p44, %p45
      %p48 = scmp.ne.s32.totalorder %s31, %s47
      %p49 = scmp.eq.s32.totalorder %s23, 0
      %p50 = por %p48, %p49
      %s52 = sadd.s32 %s51, 1
      %p55 = scmp.eq.s32.totalorder %s17, 1
      %p56 = scmp.ne.s32.totalorder %s51, %s53
      %p57 = scmp.eq.s32.totalorder %s17, 0
      %p58 = por %p56, %p57
      %p59 = scmp.ne.s32.totalorder %s51, %s53
      %p60 = scmp.eq.s32.totalorder %s22, 1
      %p61 = por %p59, %p60
      %p62 = scmp.ne.s32.totalorder %s53, %s54
      %p63 = scmp.eq.s32.totalorder %s22, 0
      %p64 = por %p62, %p63
      %p65 = scmp.ne.s32.totalorder %s53, %s54
      %p66 = scmp.eq.s32.totalorder %s23, 1
      %p67 = por %p65, %p66
      %p69 = scmp.ne.s32.totalorder %s54, %s68
      %p70 = scmp.eq.s32.totalorder %s23, 0
      %p71 = por %p69, %p70
      %s73 = sadd.s32 %s72, 1
      %p76 = scmp.eq.s32.totalorder %s17, 1
      %p77 = scmp.ne.s32.totalorder %s72, %s74
      %p78 = scmp.eq.s32.totalorder %s17, 0
      %p79 = por %p77, %p78
      %p80 = scmp.ne.s32.totalorder %s72, %s74
      %p81 = scmp.eq.s32.totalorder %s22, 1
      %p82 = por %p80, %p81
      %p83 = scmp.ne.s32.totalorder %s74, %s75
      %p84 = scmp.eq.s32.totalorder %s22, 0
      %p85 = por %p83, %p84
      %p86 = scmp.ne.s32.totalorder %s74, %s75
      %p87 = scmp.eq.s32.totalorder %s23, 1
      %p88 = por %p86, %p87
      %p90 = scmp.ne.s32.totalorder %s75, %s89
      %p91 = scmp.eq.s32.totalorder %s23, 0
      %p92 = por %p90, %p91
      %s94 = sadd.s32 %s93, 1
      %p97 = scmp.eq.s32.totalorder %s17, 1
      %p98 = scmp.ne.s32.totalorder %s93, %s95
      %p99 = scmp.eq.s32.totalorder %s17, 0
      %p100 = por %p98, %p99
      %p101 = scmp.ne.s32.totalorder %s93, %s95
      %p102 = scmp.eq.s32.totalorder %s22, 1
      %p103 = por %p101, %p102
      %p104 = scmp.ne.s32.totalorder %s95, %s96
      %p105 = scmp.eq.s32.totalorder %s22, 0
      %p106 = por %p104, %p105
      %p107 = scmp.ne.s32.totalorder %s95, %s96
      %p108 = scmp.eq.s32.totalorder %s23, 1
      %p109 = por %p107, %p108
      %p111 = scmp.ne.s32.totalorder %s96, %s110
      %p112 = scmp.eq.s32.totalorder %s23, 0
      %p113 = por %p111, %p112
      %s114 = ssub.s32 %s17, %s24
      %p115 = scmp.eq.s32.totalorder %s114, 0
      %s117 = sadd.s32 %s116, 1
      %s118 = scalar_select %p115, %s116, %s117
      %p121 = pneg %p115
      %p122 = scmp.eq.s32.totalorder %s17, 1
      %p123 = por %p121, %p122
      %p124 = scmp.ne.s32.totalorder %s116, %s119
      %p125 = scmp.eq.s32.totalorder %s17, 0
      %p126 = por %p124, %p125
      %p127 = scmp.ne.s32.totalorder %s116, %s119
      %p128 = scmp.eq.s32.totalorder %s22, 1
      %p129 = por %p127, %p128
      %p130 = scmp.ne.s32.totalorder %s119, %s120
      %p131 = scmp.eq.s32.totalorder %s22, 0
      %p132 = por %p130, %p131
      %p133 = scmp.ne.s32.totalorder %s119, %s120
      %p134 = scmp.eq.s32.totalorder %s23, 1
      %p135 = por %p133, %p134
      %p137 = scmp.ne.s32.totalorder %s120, %s136
      %p138 = scmp.eq.s32.totalorder %s23, 0
      %p139 = por %p137, %p138
      %p140 = scmp.le.s32.totalorder 1, %s17
      %p141 = scmp.lt.s32.totalorder %s17, 3
      %p142 = pnand %p140, %p141
      %p143 = pneg %p142
      // Predicated region
      $region9: #{tpu_custom_call.1} parent=5 // pred_check
        _
      $region10: #{tpu_custom_call.1} parent=5 // pred_check_branch
        %145 = sbr.rel (%p142) target = $region12
      $region11: #{tpu_custom_call.1} parent=5 // pred_region
        %s146 = ssub.s32 %s17, 1
        // Predicated region
        $region13: #{tpu_custom_call.1} parent=11 // pred_check
          %p147 = pneg %p64
        $region14: #{tpu_custom_call.1} parent=11 // pred_check_branch
          %149 = sbr.rel (%p147) target = $region16
        $region15: #{tpu_custom_call.1} parent=11 // pred_region
          %s151 = ssub.s32 512, 512
          %152 = vsyncadd [#allocation6], %s151
          %s153 = sshll.u32 [#allocation5], 4
          %s154 = int_to_ptr.vmem [resolvable:$true] %s153
          %159 = dma.hbm_to_vmem [thread:$0]  %s1, 512, %s154, [#allocation6], 128, 128, 8
        $region16: #{tpu_custom_call.1} parent=11 // pred_fallthru
          _
        // Predicated region
        $region17: #{tpu_custom_call.1} parent=11 // pred_check
          %p160 = pneg %p85
        $region18: #{tpu_custom_call.1} parent=11 // pred_check_branch
          %162 = sbr.rel (%p160) target = $region20
        $region19: #{tpu_custom_call.1} parent=11 // pred_region
          %s164 = ssub.s32 128, 128
          %165 = vsyncadd [#allocation6], %s164
          %s167 = sshll.u32 [#allocation7], 4
          %s168 = int_to_ptr.vmem [resolvable:$true] %s167
          %170 = dma.hbm_to_vmem [thread:$0]  %s2, 128, %s168, [#allocation6]
        $region20: #{tpu_custom_call.1} parent=11 // pred_fallthru
          _
        // Predicated region
        $region21: #{tpu_custom_call.1} parent=11 // pred_check
          %p171 = pneg %p106
        $region22: #{tpu_custom_call.1} parent=11 // pred_check_branch
          %173 = sbr.rel (%p171) target = $region24
        $region23: #{tpu_custom_call.1} parent=11 // pred_region
          _
        $region24: #{tpu_custom_call.1} parent=11 // pred_fallthru
          _
      $region12: #{tpu_custom_call.1} parent=5 // pred_fallthru
        _
      %p174 = scmp.lt.s32.totalorder %s17, 2
      // Predicated region
      $region25: #{tpu_custom_call.1} parent=5 // pred_check
        %p175 = pneg %p174
      $region26: #{tpu_custom_call.1} parent=5 // pred_check_branch
        %177 = sbr.rel (%p175) target = $region28
      $region27: #{tpu_custom_call.1} parent=5 // pred_region
        // Predicated region
        $region29: #{tpu_custom_call.1} parent=27 // pred_check
          %p178 = pneg %p37
        $region30: #{tpu_custom_call.1} parent=27 // pred_check_branch
          %180 = sbr.rel (%p178) target = $region32
        $region31: #{tpu_custom_call.1} parent=27 // pred_region
          %s181 = sand.u32 %s27, 1
          %s182 = scalar_lea.sflag [#allocation3], %s181
          %s183 = sand.u32 %s27, 1
          %s184 = smul.addr %s183, 8
          %s185 = scalar_lea.vmem [#allocation2], %s184
          %s187 = ssub.s32 128, 128
          %188 = vsyncadd %s182, %s187
          %s189 = smul.addr %s17, 128
          %s190 = scalar_lea.hbm %s0, %s189
          %s192 = sshll.u32 %s185, 4
          %s193 = int_to_ptr.vmem [resolvable:$true] %s192
          %195 = dma.hbm_to_vmem [thread:$0]  %s190, 128, %s193, %s182
        $region32: #{tpu_custom_call.1} parent=27 // pred_fallthru
          _
      $region28: #{tpu_custom_call.1} parent=5 // pred_fallthru
        _
      %p196 = scmp.le.s32.totalorder 1, %s17
      %p197 = scmp.lt.s32.totalorder %s17, 3
      %p198 = pnand %p196, %p197
      %p199 = pneg %p198
      // Predicated region
      $region33: #{tpu_custom_call.1} parent=5 // pred_check
        _
      $region34: #{tpu_custom_call.1} parent=5 // pred_check_branch
        %201 = sbr.rel (%p198) target = $region36
      $region35: #{tpu_custom_call.1} parent=5 // pred_region
        %s202 = ssub.s32 %s17, 1
        %s203 = sand.u32 %s30, 1
        %s204 = scalar_lea.sflag [#allocation3], %s203
        %s205 = sand.u32 %s30, 1
        %s206 = smul.addr %s205, 8
        %s207 = scalar_lea.vmem [#allocation2], %s206
        // Predicated region
        $region37: #{tpu_custom_call.1} parent=35 // pred_check
          %p208 = pneg %p43
        $region38: #{tpu_custom_call.1} parent=35 // pred_check_branch
          %210 = sbr.rel (%p208) target = $region40
        $region39: #{tpu_custom_call.1} parent=35 // pred_region
          %211 = dma.done %s204, 128
        $region40: #{tpu_custom_call.1} parent=35 // pred_fallthru
          _
        // Predicated region
        $region41: #{tpu_custom_call.1} parent=35 // pred_check
          %p212 = pneg %p64
        $region42: #{tpu_custom_call.1} parent=35 // pred_check_branch
          %214 = sbr.rel (%p212) target = $region44
        $region43: #{tpu_custom_call.1} parent=35 // pred_region
          %215 = dma.done [#allocation6], 512
        $region44: #{tpu_custom_call.1} parent=35 // pred_fallthru
          _
        // Predicated region
        $region45: #{tpu_custom_call.1} parent=35 // pred_check
          %p216 = pneg %p85
        $region46: #{tpu_custom_call.1} parent=35 // pred_check_branch
          %218 = sbr.rel (%p216) target = $region48
        $region47: #{tpu_custom_call.1} parent=35 // pred_region
          %219 = dma.done [#allocation6], 128
        $region48: #{tpu_custom_call.1} parent=35 // pred_fallthru
          _
        %s220 = sand.u32 %s30, 1
        %s221 = scalar_lea.sflag [#allocation3], %s220
        %s222 = sand.u32 %s30, 1
        %s223 = smul.addr %s222, 8
        %s224 = scalar_lea.vmem [#allocation2], %s223
        %p225 = pneg %p43
        %p226 = pneg %p40
        %p227 = pneg %p64
        %p228 = pneg %p61
        %p229 = pneg %p85
        %p230 = pneg %p82
        %p231 = pneg %p106
        %p232 = pneg %p103
        %p233 = pneg %p132
        %p234 = pneg %p129
        %s235 = sand.u32 %s119, 1
        %s236 = scalar_lea.sflag [#allocation4], %s235
        %s237 = sand.u32 %s119, 1
        %s238 = smul.addr %s237, 8
        %s239 = scalar_lea.vmem [#allocation8], %s238
        %v240 = vld [vmem:[%s207] sm:$0xff]
        %v241 = vld [vmem:[#allocation5] sm:$0xff]
        %v242 = vld [vmem:[#allocation5 + $0x8] sm:$0xff]
        %v243 = vld [vmem:[#allocation5 + $0x10] sm:$0xff]
        %v244 = vld [vmem:[#allocation5 + $0x18] sm:$0xff]
        %vm245 = vcmask 261120
        %v247 = vsel %vm245, %v240, 0
        %249 = vmatprep.subr.mxu0 0.0
        %250 = vmatpush1.msra.mxu0 %v241
        %251 = vmatprep.subr.mxu0 0.0
        %252 = vmatpush1.msra.mxu0 %v242
        %253 = vmatprep.subr.mxu0 0.0
        %254 = vmatpush1.msra.mxu0 %v243
        %255 = vmatprep.subr.mxu0 0.0
        %256 = vmatpush1.msra.mxu0 %v244
        %257 = vmatprep.subr.mxu0 0.0
        %258 = vmatpush1.msra.mxu0 0.0
        %259 = vmatprep.subr.mxu0 0.0
        %260 = vmatpush1.msra.mxu0 0.0
        %261 = vmatprep.subr.mxu0 0.0
        %262 = vmatpush1.msra.mxu0 0.0
        %263 = vmatprep.subr.mxu0 0.0
        %264 = vmatpush1.msra.mxu0 0.0
        %265 = vmatprep.subr.mxu0 0.0
        %266 = vmatpush1.msra.mxu0 0.0
        %267 = vmatprep.subr.mxu0 0.0
        %268 = vmatpush1.msra.mxu0 0.0
        %269 = vmatprep.subr.mxu0 0.0
        %270 = vmatpush1.msra.mxu0 0.0
        %271 = vmatprep.subr.mxu0 0.0
        %272 = vmatpush1.msra.mxu0 0.0
        %273 = vmatprep.subr.mxu0 0.0
        %274 = vmatpush1.msra.mxu0 0.0
        %275 = vmatprep.subr.mxu0 0.0
        %276 = vmatpush1.msra.mxu0 0.0
        %277 = vmatprep.subr.mxu0 0.0
        %278 = vmatpush1.msra.mxu0 0.0
        %279 = vmatprep.subr.mxu0 0.0
        %280 = vmatpush1.msra.mxu0 0.0
        %281 = vmatprep.subr.mxu0 0.0
        %282 = vmatpush1.msra.mxu0 0.0
        %283 = vmatprep.subr.mxu0 0.0
        %284 = vmatpush1.msra.mxu0 0.0
        %285 = vmatprep.subr.mxu0 0.0
        %286 = vmatpush1.msra.mxu0 0.0
        %287 = vmatprep.subr.mxu0 0.0
        %288 = vmatpush1.msra.mxu0 0.0
        %289 = vmatprep.subr.mxu0 0.0
        %290 = vmatpush1.msra.mxu0 0.0
        %291 = vmatprep.subr.mxu0 0.0
        %292 = vmatpush1.msra.mxu0 0.0
        %293 = vmatprep.subr.mxu0 0.0
        %294 = vmatpush1.msra.mxu0 0.0
        %295 = vmatprep.subr.mxu0 0.0
        %296 = vmatpush1.msra.mxu0 0.0
        %297 = vmatprep.subr.mxu0 0.0
        %298 = vmatpush1.msra.mxu0 0.0
        %299 = vmatprep.subr.mxu0 0.0
        %300 = vmatpush1.msra.mxu0 0.0
        %301 = vmatprep.subr.mxu0 0.0
        %302 = vmatpush1.msra.mxu0 0.0
        %303 = vmatprep.subr.mxu0 0.0
        %304 = vmatpush1.msra.mxu0 0.0
        %305 = vmatprep.subr.mxu0 0.0
        %306 = vmatpush1.msra.mxu0 0.0
        %307 = vmatprep.subr.mxu0 0.0
        %308 = vmatpush1.msra.mxu0 0.0
        %309 = vmatprep.subr.mxu0 0.0
        %310 = vmatpush1.msra.mxu0 0.0
        %311 = vmatprep.subr.mxu0 0.0
        %312 = vmatpush1.msra.mxu0 0.0
        %313 = vmatprep.mubr.f32.mxu0 0.0
        %314 = vmatmul.mubr.f32.gmra.mrb[0].mxu0 %v247
        %v315 = vpop.f32.mrb[0].mxu0
        %v316 = vadd.f32 0.0, %v315
        %v317 = vpop.f32.mrb[0].mxu0
        %318 = vdwg.mxu0
        %v319 = vld [vmem:[#allocation7] sm:$0xff]
        %v320 = vld [vmem:[%s3] sm:$0xff]
        %v321 = vmul.f32 %v316, %v319
        %323 = vrot.lane.b32.xlu0 %v320, 24
        %v324 = vpop.permute.xlu0 %323
        %v326 = vmul.f32 %v316, %v324
        %328 = vrot.lane.b32.xlu0 %v326, 104
        %v329 = vpop.permute.xlu0 %328
        %v331 = vadd.f32 %v321, %v329
        %333 = vrot.lane.b32.xlu0 %v319, 8
        %v334 = vpop.permute.xlu0 %333
        %v336 = vmul.f32 %v316, %v334
        %337 = vrot.lane.b32.xlu0 %v320, 32
        %v338 = vpop.permute.xlu0 %337
        %v340 = vmul.f32 %v316, %v338
        %342 = vrot.lane.b32.xlu0 %v340, 104
        %v343 = vpop.permute.xlu0 %342
        %v345 = vadd.f32 %v336, %v343
        %347 = vrot.lane.b32.xlu0 %v345, 120
        %v348 = vpop.permute.xlu0 %347
        %vm349 = vcmask 64512
        %v351 = vsel %vm349, %v331, 0
        %v353 = vsel %vm349, %v348, 0
        %355 = vmatprep.subr.mxu0 0.0
        %356 = vmatpush1.xpose.msra.mxu0 %v353
        %357 = vmatprep.subr.mxu0 0.0
        %358 = vmatpush1.xpose.msra.mxu0 0.0
        %359 = vmatprep.subr.mxu0 0.0
        %360 = vmatpush1.xpose.msra.mxu0 0.0
        %361 = vmatprep.subr.mxu0 0.0
        %362 = vmatpush1.xpose.msra.mxu0 0.0
        %363 = vmatprep.subr.mxu0 0.0
        %364 = vmatpush1.xpose.msra.mxu0 0.0
        %365 = vmatprep.subr.mxu0 0.0
        %366 = vmatpush1.xpose.msra.mxu0 0.0
        %367 = vmatprep.subr.mxu0 0.0
        %368 = vmatpush1.xpose.msra.mxu0 0.0
        %369 = vmatprep.subr.mxu0 0.0
        %370 = vmatpush1.xpose.msra.mxu0 0.0
        %371 = vmatprep.subr.mxu0 0.0
        %372 = vmatpush1.xpose.msra.mxu0 0.0
        %373 = vmatprep.subr.mxu0 0.0
        %374 = vmatpush1.xpose.msra.mxu0 0.0
        %375 = vmatprep.subr.mxu0 0.0
        %376 = vmatpush1.xpose.msra.mxu0 0.0
        %377 = vmatprep.subr.mxu0 0.0
        %378 = vmatpush1.xpose.msra.mxu0 0.0
        %379 = vmatprep.subr.mxu0 0.0
        %380 = vmatpush1.xpose.msra.mxu0 0.0
        %381 = vmatprep.subr.mxu0 0.0
        %382 = vmatpush1.xpose.msra.mxu0 0.0
        %383 = vmatprep.subr.mxu0 0.0
        %384 = vmatpush1.xpose.msra.mxu0 0.0
        %385 = vmatprep.subr.mxu0 0.0
        %386 = vmatpush1.xpose.msra.mxu0 0.0
        %387 = vmatprep.subr.mxu0 0.0
        %388 = vmatpush1.xpose.msra.mxu0 0.0
        %389 = vmatprep.subr.mxu0 0.0
        %390 = vmatpush1.xpose.msra.mxu0 0.0
        %391 = vmatprep.subr.mxu0 0.0
        %392 = vmatpush1.xpose.msra.mxu0 0.0
        %393 = vmatprep.subr.mxu0 0.0
        %394 = vmatpush1.xpose.msra.mxu0 0.0
        %395 = vmatprep.subr.mxu0 0.0
        %396 = vmatpush1.xpose.msra.mxu0 0.0
        %397 = vmatprep.subr.mxu0 0.0
        %398 = vmatpush1.xpose.msra.mxu0 0.0
        %399 = vmatprep.subr.mxu0 0.0
        %400 = vmatpush1.xpose.msra.mxu0 0.0
        %401 = vmatprep.subr.mxu0 0.0
        %402 = vmatpush1.xpose.msra.mxu0 0.0
        %403 = vmatprep.subr.mxu0 0.0
        %404 = vmatpush1.xpose.msra.mxu0 0.0
        %405 = vmatprep.subr.mxu0 0.0
        %406 = vmatpush1.xpose.msra.mxu0 0.0
        %407 = vmatprep.subr.mxu0 0.0
        %408 = vmatpush1.xpose.msra.mxu0 0.0
        %409 = vmatprep.subr.mxu0 0.0
        %410 = vmatpush1.xpose.msra.mxu0 0.0
        %411 = vmatprep.subr.mxu0 0.0
        %412 = vmatpush1.xpose.msra.mxu0 0.0
        %413 = vmatprep.subr.mxu0 0.0
        %414 = vmatpush1.xpose.msra.mxu0 0.0
        %415 = vmatprep.subr.mxu0 0.0
        %416 = vmatpush1.xpose.msra.mxu0 0.0
        %417 = vmatprep.subr.mxu0 0.0
        %418 = vmatpush1.xpose.msra.mxu0 0.0
        %419 = vmatprep.mubr.f32.mxu0 0.0
        %420 = vmatmul.mubr.f32.gmra.mrb[0].mxu0 %v351
        %v421 = vpop.f32.mrb[0].mxu0
        %v422 = vadd.f32 0.0, %v421
        %v423 = vpop.f32.mrb[0].mxu0
        %424 = vdwg.mxu0
        %v425 = vlaneseq
        %v426 = vshrl.u32 %v425, 7
        %v427 = vlaneseq
        %v428 = vand.u32 %v427, 127
        %vm429 = vcmp.le.s32.totalorder %v428, %v426
        %v430 = vsel %vm429, %v422, -inf
        %v431 = vsel %vm349, %v430, -inf
        %432 = vmax.xlane.f32.xlu0 %v431
        %v433 = vpop.xlane.xlu0 %432
        %v434 = vsub.f32 %v430, %v433
        %v435 = vmul.f32 %v434, 1.442695
        %v436 = vpow.pop %v435
        %v437 = vsel %vm349, %v436, 0.0
        %438 = vadd.xlane.f32.xlu0 %v437
        %v439 = vpop.xlane.xlu0 %438
        %v440 = vrcp.pop %v439
        %v441 = vmul.f32 %v436, %v440
        %443 = vrot.lane.b32.xlu0 %v316, 112
        %v444 = vpop.permute.xlu0 %443
        %v447 = vsel %vm349, %v441, 0
        %449 = vmatprep.subr.mxu0 0.0
        %450 = vmatpush1.msra.mxu0 %v444
        %451 = vmatprep.subr.mxu0 0.0
        %452 = vmatpush1.msra.mxu0 0.0
        %453 = vmatprep.subr.mxu0 0.0
        %454 = vmatpush1.msra.mxu0 0.0
        %455 = vmatprep.subr.mxu0 0.0
        %456 = vmatpush1.msra.mxu0 0.0
        %457 = vmatprep.subr.mxu0 0.0
        %458 = vmatpush1.msra.mxu0 0.0
        %459 = vmatprep.subr.mxu0 0.0
        %460 = vmatpush1.msra.mxu0 0.0
        %461 = vmatprep.subr.mxu0 0.0
        %462 = vmatpush1.msra.mxu0 0.0
        %463 = vmatprep.subr.mxu0 0.0
        %464 = vmatpush1.msra.mxu0 0.0
        %465 = vmatprep.subr.mxu0 0.0
        %466 = vmatpush1.msra.mxu0 0.0
        %467 = vmatprep.subr.mxu0 0.0
        %468 = vmatpush1.msra.mxu0 0.0
        %469 = vmatprep.subr.mxu0 0.0
        %470 = vmatpush1.msra.mxu0 0.0
        %471 = vmatprep.subr.mxu0 0.0
        %472 = vmatpush1.msra.mxu0 0.0
        %473 = vmatprep.subr.mxu0 0.0
        %474 = vmatpush1.msra.mxu0 0.0
        %475 = vmatprep.subr.mxu0 0.0
        %476 = vmatpush1.msra.mxu0 0.0
        %477 = vmatprep.subr.mxu0 0.0
        %478 = vmatpush1.msra.mxu0 0.0
        %479 = vmatprep.subr.mxu0 0.0
        %480 = vmatpush1.msra.mxu0 0.0
        %481 = vmatprep.subr.mxu0 0.0
        %482 = vmatpush1.msra.mxu0 0.0
        %483 = vmatprep.subr.mxu0 0.0
        %484 = vmatpush1.msra.mxu0 0.0
        %485 = vmatprep.subr.mxu0 0.0
        %486 = vmatpush1.msra.mxu0 0.0
        %487 = vmatprep.subr.mxu0 0.0
        %488 = vmatpush1.msra.mxu0 0.0
        %489 = vmatprep.subr.mxu0 0.0
        %490 = vmatpush1.msra.mxu0 0.0
        %491 = vmatprep.subr.mxu0 0.0
        %492 = vmatpush1.msra.mxu0 0.0
        %493 = vmatprep.subr.mxu0 0.0
        %494 = vmatpush1.msra.mxu0 0.0
        %495 = vmatprep.subr.mxu0 0.0
        %496 = vmatpush1.msra.mxu0 0.0
        %497 = vmatprep.subr.mxu0 0.0
        %498 = vmatpush1.msra.mxu0 0.0
        %499 = vmatprep.subr.mxu0 0.0
        %500 = vmatpush1.msra.mxu0 0.0
        %501 = vmatprep.subr.mxu0 0.0
        %502 = vmatpush1.msra.mxu0 0.0
        %503 = vmatprep.subr.mxu0 0.0
        %504 = vmatpush1.msra.mxu0 0.0
        %505 = vmatprep.subr.mxu0 0.0
        %506 = vmatpush1.msra.mxu0 0.0
        %507 = vmatprep.subr.mxu0 0.0
        %508 = vmatpush1.msra.mxu0 0.0
        %509 = vmatprep.subr.mxu0 0.0
        %510 = vmatpush1.msra.mxu0 0.0
        %511 = vmatprep.subr.mxu0 0.0
        %512 = vmatpush1.msra.mxu0 0.0
        %513 = vmatprep.mubr.f32.mxu0 0.0
        %514 = vmatmul.mubr.f32.gmra.mrb[0].mxu0 %v447
        %v515 = vpop.f32.mrb[0].mxu0
        %v516 = vadd.f32 0.0, %v515
        %v517 = vpop.f32.mrb[0].mxu0
        %518 = vdwg.mxu0
        %519 = vst.msk [vmem:[%s239] sm:$0xff] %vm349, %v516
        %s520 = sand.u32 %s119, 1
        %s521 = scalar_lea.sflag [#allocation4], %s520
        %s522 = sand.u32 %s119, 1
        %s523 = smul.addr %s522, 8
        %s524 = scalar_lea.vmem [#allocation8], %s523
        // Predicated region
        $region49: #{tpu_custom_call.1} parent=35 // pred_check
          %p525 = pneg %p129
        $region50: #{tpu_custom_call.1} parent=35 // pred_check_branch
          %527 = sbr.rel (%p525) target = $region52
        $region51: #{tpu_custom_call.1} parent=35 // pred_region
          %s529 = ssub.s32 128, 128
          %530 = vsyncadd %s521, %s529
          %s531 = smul.addr %s22, 128
          %s532 = scalar_lea.hbm %s4, %s531
          %s534 = sshll.u32 %s524, 4
          %s535 = int_to_ptr.vmem [resolvable:$true] %s534
          %537 = dma.vmem_to_hbm [thread:$0]  %s535, 128, %s532, %s521
        $region52: #{tpu_custom_call.1} parent=35 // pred_fallthru
          _
      $region36: #{tpu_custom_call.1} parent=5 // pred_fallthru
        _
      %p538 = scmp.le.s32.totalorder 2, %s17
      // Predicated region
      $region53: #{tpu_custom_call.1} parent=5 // pred_check
        %p539 = pneg %p538
      $region54: #{tpu_custom_call.1} parent=5 // pred_check_branch
        %541 = sbr.rel (%p539) target = $region56
      $region55: #{tpu_custom_call.1} parent=5 // pred_region
        %s542 = ssub.s32 %s17, 2
        // Predicated region
        $region57: #{tpu_custom_call.1} parent=55 // pred_check
          %p543 = pneg %p135
        $region58: #{tpu_custom_call.1} parent=55 // pred_check_branch
          %545 = sbr.rel (%p543) target = $region60
        $region59: #{tpu_custom_call.1} parent=55 // pred_region
          %s546 = sand.u32 %s120, 1
          %s547 = scalar_lea.sflag [#allocation4], %s546
          %s548 = sand.u32 %s120, 1
          %s549 = smul.addr %s548, 8
          %s550 = scalar_lea.vmem [#allocation8], %s549
          %551 = dma.done %s547, 128
        $region60: #{tpu_custom_call.1} parent=55 // pred_fallthru
          _
      $region56: #{tpu_custom_call.1} parent=5 // pred_fallthru
        _
    $region6: #{tpu_custom_call.1} parent=1 // loop_footer
      %s21 = sadd.s32 1, %s17
    $region7: #{tpu_custom_call.1} parent=1 // loop_footer_branch
      %16 = sbr.rel target = $region3
    $region8: #{tpu_custom_call.1} parent=1 // loop_exit
      _
    %552 = vsyncpa [#allocation3], 1
    %s553 = scalar_lea.sflag [#allocation3], 1
    %554 = vsyncpa %s553, 1
    %555 = vsyncpa [#allocation6], 1
    %556 = vsyncpa [#allocation4], 1
    %s557 = scalar_lea.sflag [#allocation4], 1
    %558 = vsyncpa %s557, 1

</llo_original>
